<compile_context>
chip_gen: v7x
topology: tpu7x:2x2x1
jax: 0.10.0
libtpu: 0.0.40
codegen_flags: <defaults>
</compile_context>

<pallas_src>
import jax
import jax.numpy as jnp
from jax.experimental import pallas as pl
from jax.experimental.pallas import tpu as pltpu


# --------------------------------- kernel --------------------------------------
def residual_block_kernel(x_ref, w1_ref, b1_ref, w2_ref, wd_ref, bsum_ref,
                          o_ref, xpad_ref, mpad_ref):
    """One image per grid step.

    x_ref   : (1, H, W*Cin)        bf16 input, channels-last flattened into lanes
    w1_ref  : (3, W*Cin,  W*Cout)  bf16 banded conv1 weights (BN1 scale folded in)
    w2_ref  : (3, W*Cout, W*Cout)  bf16 banded conv2 weights (BN2 scale folded in)
    wd_ref  : (W*Cin, W*Cout)      bf16 block-diagonal 1x1 downsample (BNd folded)
    b1_ref  : (1, W*Cout)          f32 BN1 bias, tiled over W
    bsum_ref: (1, W*Cout)          f32 (BN2 bias + downsample BN bias), tiled
    o_ref   : (1, H, W*Cout)       f32 output (lane-dense: W*Cout is the lane dim)
    xpad_ref: (H+2, W*Cin)         f32 scratch — input with 1-row halo
    mpad_ref: (H+2, W*Cout)        f32 scratch — conv1 output with 1-row halo
    """
    H = o_ref.shape[1]
    WCi = x_ref.shape[2]
    WCo = o_ref.shape[2]

    # ---- stage input rows; zero only the 2 halo rows (no full zero-fill) ----
    xpad_ref[0:1, :] = jnp.zeros((1, WCi), jnp.float32)
    xpad_ref[H + 1:H + 2, :] = jnp.zeros((1, WCi), jnp.float32)
    xpad_ref[1:H + 1, :] = x_ref[0].astype(jnp.float32)

    # ---- conv1 (3 banded dots, bf16 operands, f32 accumulate) + bias + ReLU ----
    acc1 = jnp.zeros((H, WCo), jnp.float32)
    for kh in range(3):
        acc1 = acc1 + jnp.dot(xpad_ref[kh:kh + H, :].astype(jnp.bfloat16),
                              w1_ref[kh],
                              preferred_element_type=jnp.float32)
    h1 = jnp.maximum(acc1 + b1_ref[...], 0.0)

    # ---- stage conv1 output with its 1-row halo for conv2 ----
    mpad_ref[0:1, :] = jnp.zeros((1, WCo), jnp.float32)
    mpad_ref[H + 1:H + 2, :] = jnp.zeros((1, WCo), jnp.float32)
    mpad_ref[1:H + 1, :] = h1

    # ---- conv2 (3 banded dots) ----
    acc2 = jnp.zeros((H, WCo), jnp.float32)
    for kh in range(3):
        acc2 = acc2 + jnp.dot(mpad_ref[kh:kh + H, :].astype(jnp.bfloat16),
                              w2_ref[kh],
                              preferred_element_type=jnp.float32)

    # ---- downsample branch: 1x1 conv as one block-diagonal dot ----
    ident = jnp.dot(x_ref[0], wd_ref[...], preferred_element_type=jnp.float32)

    # ---- residual add (+ fused biases) + final ReLU, lane-dense store ----
    out = jnp.maximum(acc2 + ident + bsum_ref[...], 0.0)
    o_ref[...] = out[None]


# ------------------------------ wrapper helpers ---------------------------------
def fold_bn(gamma, beta, mean, var, eps=1e-5):
    scale = gamma / jnp.sqrt(var + eps)
    bias = beta - mean * scale
    return scale.astype(jnp.float32), bias.astype(jnp.float32)


def band_conv_weights(w_hwio, W):
    """Fold the kw taps + W zero-padding of a conv into banded matmul weights.

    w_hwio: (KH, KW, Ci, Co)  ->  (KH, W*Ci, W*Co) with
      out[kh, wi*Ci+ci, wo*Co+co] = w[kh, wi-wo+pad, ci, co]  (0 outside the band)
    """
    KH, KW, Ci, Co = w_hwio.shape
    p = (KW - 1) // 2
    wi = jnp.arange(W)[:, None]
    wo = jnp.arange(W)[None, :]
    kw = wi - wo + p                                   # (W, W)
    valid = (kw >= 0) & (kw < KW)
    g = w_hwio[:, jnp.clip(kw, 0, KW - 1)]             # (KH, W, W, Ci, Co)
    g = jnp.where(valid[None, :, :, None, None], g, 0.0)
    g = jnp.transpose(g, (0, 1, 3, 2, 4))              # (KH, W, Ci, W, Co)
    return g.reshape(KH, W * Ci, W * Co)


def residual_block(x_nchw, params, eps=1e-5):
    """NCHW in / NCHW out (matches the PyTorch module interface)."""
    N, Cin, H, W = x_nchw.shape
    Cout = params["w1"].shape[0]

    s1, b1 = fold_bn(*params["bn1"], eps)
    s2, b2 = fold_bn(*params["bn2"], eps)
    sd, bd = fold_bn(*params["bnd"], eps)

    # OIHW -> HWIO, fold BN scale into the output-channel axis, band, cast bf16.
    w1h = jnp.transpose(params["w1"], (2, 3, 1, 0)) * s1      # (3,3,Cin,Cout)
    w2h = jnp.transpose(params["w2"], (2, 3, 1, 0)) * s2      # (3,3,Cout,Cout)
    wdh = jnp.transpose(params["wd"], (2, 3, 1, 0)) * sd      # (1,1,Cin,Cout)
    Wb1 = band_conv_weights(w1h, W).astype(jnp.bfloat16)      # (3, W*Cin,  W*Cout)
    Wb2 = band_conv_weights(w2h, W).astype(jnp.bfloat16)      # (3, W*Cout, W*Cout)
    Wbd = band_conv_weights(wdh, W)[0].astype(jnp.bfloat16)   # (W*Cin, W*Cout)

    # Biases tiled to the flattened (w, c) lane layout; b2 + bd pre-summed.
    b1t = jnp.tile(b1, W).reshape(1, W * Cout)
    bst = jnp.tile(b2 + bd, W).reshape(1, W * Cout)

    # NCHW -> (N, H, W*Cin), bf16 (halves HBM traffic, bf16 MXU throughput).
    x2 = jnp.transpose(x_nchw, (0, 2, 3, 1)).reshape(N, H, W * Cin)
    x2 = x2.astype(jnp.bfloat16)

    grid_spec = pltpu.PrefetchScalarGridSpec(
        num_scalar_prefetch=0,
        grid=(N,),
        in_specs=[
            pl.BlockSpec((1, H, W * Cin), lambda n: (n, 0, 0)),           # x
            pl.BlockSpec((3, W * Cin, W * Cout), lambda n: (0, 0, 0)),    # Wb1
            pl.BlockSpec((1, W * Cout), lambda n: (0, 0)),                # b1
            pl.BlockSpec((3, W * Cout, W * Cout), lambda n: (0, 0, 0)),   # Wb2
            pl.BlockSpec((W * Cin, W * Cout), lambda n: (0, 0)),          # Wbd
            pl.BlockSpec((1, W * Cout), lambda n: (0, 0)),                # b2+bd
        ],
        out_specs=pl.BlockSpec((1, H, W * Cout), lambda n: (n, 0, 0)),
        scratch_shapes=[
            pltpu.VMEM((H + 2, W * Cin), jnp.float32),
            pltpu.VMEM((H + 2, W * Cout), jnp.float32),
        ],
    )

    out2 = pl.pallas_call(
        residual_block_kernel,
        out_shape=jax.ShapeDtypeStruct((N, H, W * Cout), jnp.float32),
        grid_spec=grid_spec,
        compiler_params=pltpu.CompilerParams(
            dimension_semantics=("parallel",),          # split batch across cores
            vmem_limit_bytes=32 * 1024 * 1024,
        ),
    )(x2, Wb1, b1t, Wb2, Wbd, bst)

    # (N, H, W*Cout) -> NCHW
    return jnp.transpose(out2.reshape(N, H, W, Cout), (0, 3, 1, 2))


# ---------------------------- reference (plain JAX, f32) ------------------------
def _conv_nhwc(x, w, pad=1):
    return jax.lax.conv_general_dilated(
        x, w, window_strides=(1, 1), padding=((pad, pad), (pad, pad)),
        dimension_numbers=("NHWC", "HWIO", "NHWC"))


def residual_block_ref(x_nchw, params, eps=1e-5):
    x = jnp.transpose(x_nchw, (0, 2, 3, 1)).astype(jnp.float32)
    w1 = jnp.transpose(params["w1"], (2, 3, 1, 0))
    w2 = jnp.transpose(params["w2"], (2, 3, 1, 0))
    wd = jnp.transpose(params["wd"], (2, 3, 1, 0))
    s1, b1 = fold_bn(*params["bn1"], eps)
    s2, b2 = fold_bn(*params["bn2"], eps)
    sd, bd = fold_bn(*params["bnd"], eps)
    out = jnp.maximum(_conv_nhwc(x, w1) * s1 + b1, 0.0)
    out = _conv_nhwc(out, w2) * s2 + b2
    ident = _conv_nhwc(x, wd, pad=0) * sd + bd
    return jnp.transpose(jnp.maximum(out + ident, 0.0), (0, 3, 1, 2))


# --------------------------------- main -----------------------------------------
if __name__ == "__main__":
    key = jax.random.PRNGKey(0)
    N, Cin, Cout, H, W = 2, 4, 8, 16, 16     # stride=1, Cin != Cout -> downsample

    ks = jax.random.split(key, 4)
    x = jax.random.normal(ks[0], (N, Cin, H, W), jnp.float32)          # NCHW
    w1 = 0.1 * jax.random.normal(ks[1], (Cout, Cin, 3, 3), jnp.float32)   # OIHW
    w2 = 0.1 * jax.random.normal(ks[2], (Cout, Cout, 3, 3), jnp.float32)
    wd = 0.1 * jax.random.normal(ks[3], (Cout, Cin, 1, 1), jnp.float32)

    def bn_params(i, c):
        r = jnp.arange(c, dtype=jnp.float32)
        gamma = 1.0 + 0.10 * r + 0.01 * i
        beta = 0.05 * r - 0.02 * i
        mean = 0.01 * r
        var = 1.0 + 0.02 * r
        return gamma, beta, mean, var

    params = {
        "w1": w1, "w2": w2, "wd": wd,
        "bn1": bn_params(1, Cout),
        "bn2": bn_params(2, Cout),
        "bnd": bn_params(3, Cout),
    }

    out = jax.block_until_ready(residual_block(x, params))
    ref = jax.block_until_ready(residual_block_ref(x, params))

    assert out.shape == (N, Cout, H, W), out.shape
    # bf16 MXU operands vs f32 reference -> loose tolerance.
    err = float(jnp.max(jnp.abs(out - ref)))
    assert jnp.allclose(out, ref, rtol=5e-2, atol=5e-2), err
    print("KERNEL_OK")
</pallas_src>

<mosaic_0001>
module attributes {stable_mosaic.version = 11 : i64} {
  func.func @residual_block_kernel(%arg0: i32, %arg1: memref<1x16x64xbf16, #tpu.memory_space<vmem>>, %arg2: memref<3x64x128xbf16, #tpu.memory_space<vmem>>, %arg3: memref<1x128xf32, #tpu.memory_space<vmem>>, %arg4: memref<3x128x128xbf16, #tpu.memory_space<vmem>>, %arg5: memref<64x128xbf16, #tpu.memory_space<vmem>>, %arg6: memref<1x128xf32, #tpu.memory_space<vmem>>, %arg7: memref<1x16x128xf32, #tpu.memory_space<vmem>>, %arg8: memref<18x64xf32, #tpu.memory_space<vmem>>, %arg9: memref<18x128xf32, #tpu.memory_space<vmem>>) attributes {dimension_semantics = [#tpu.dimension_semantics<parallel>], iteration_bounds = array<i64: 2>, scalar_prefetch = 0 : i64, scratch_operands = 2 : i64, tpu.core_type = #tpu.core_type<tc>, window_params = [{transform_indices = @transform_0, window_bounds = array<i64: 1, 16, 64>}, {pipeline_mode = #tpu.pipeline_mode<synchronous>, transform_indices = @transform_1, window_bounds = array<i64: 3, 64, 128>}, {pipeline_mode = #tpu.pipeline_mode<synchronous>, transform_indices = @transform_2, window_bounds = array<i64: 1, 128>}, {pipeline_mode = #tpu.pipeline_mode<synchronous>, transform_indices = @transform_3, window_bounds = array<i64: 3, 128, 128>}, {pipeline_mode = #tpu.pipeline_mode<synchronous>, transform_indices = @transform_4, window_bounds = array<i64: 64, 128>}, {pipeline_mode = #tpu.pipeline_mode<synchronous>, transform_indices = @transform_5, window_bounds = array<i64: 1, 128>}, {transform_indices = @transform_6, window_bounds = array<i64: 1, 16, 128>}]} {
    %cst = arith.constant 0.000000e+00 : f32
    %0 = vector.broadcast %cst : f32 to vector<1x64xf32>
    %c0 = arith.constant 0 : index
    %c0_0 = arith.constant 0 : index
    %1 = vector.load %arg8[%c0, %c0_0] : memref<18x64xf32, #tpu.memory_space<vmem>>, vector<1x64xf32>
    tpu.vector_store %arg8[%c0, %c0_0], %0 {strides = array<i32>} : memref<18x64xf32, #tpu.memory_space<vmem>>, vector<1x64xf32>,
    %cst_1 = arith.constant 0.000000e+00 : f32
    %2 = vector.broadcast %cst_1 : f32 to vector<1x64xf32>
    %c17 = arith.constant 17 : index
    %c0_2 = arith.constant 0 : index
    %3 = vector.load %arg8[%c17, %c0_2] : memref<18x64xf32, #tpu.memory_space<vmem>>, vector<1x64xf32>
    tpu.vector_store %arg8[%c17, %c0_2], %2 {strides = array<i32>} : memref<18x64xf32, #tpu.memory_space<vmem>>, vector<1x64xf32>,
    %c0_3 = arith.constant 0 : index
    %c0_4 = arith.constant 0 : index
    %c0_5 = arith.constant 0 : index
    %4 = vector.load %arg1[%c0_3, %c0_4, %c0_5] : memref<1x16x64xbf16, #tpu.memory_space<vmem>>, vector<1x16x64xbf16>
    %5 = vector.shape_cast %4 : vector<1x16x64xbf16> to vector<16x64xbf16>
    %6 = arith.extf %5 : vector<16x64xbf16> to vector<16x64xf32>
    %c1 = arith.constant 1 : index
    %c0_6 = arith.constant 0 : index
    %7 = vector.load %arg8[%c1, %c0_6] : memref<18x64xf32, #tpu.memory_space<vmem>>, vector<16x64xf32>
    tpu.vector_store %arg8[%c1, %c0_6], %6 {strides = array<i32>} : memref<18x64xf32, #tpu.memory_space<vmem>>, vector<16x64xf32>,
    %cst_7 = arith.constant 0.000000e+00 : f32
    %8 = vector.broadcast %cst_7 : f32 to vector<16x128xf32>
    %c0_8 = arith.constant 0 : index
    %c0_9 = arith.constant 0 : index
    %9 = vector.load %arg8[%c0_8, %c0_9] : memref<18x64xf32, #tpu.memory_space<vmem>>, vector<16x64xf32>
    %10 = arith.truncf %9 : vector<16x64xf32> to vector<16x64xbf16>
    %c0_10 = arith.constant 0 : index
    %c0_11 = arith.constant 0 : index
    %c0_12 = arith.constant 0 : index
    %11 = vector.load %arg2[%c0_10, %c0_11, %c0_12] : memref<3x64x128xbf16, #tpu.memory_space<vmem>>, vector<1x64x128xbf16>
    %12 = vector.shape_cast %11 : vector<1x64x128xbf16> to vector<64x128xbf16>
    %cst_13 = arith.constant dense<0.000000e+00> : vector<16x128xf32>
    %13 = tpu.matmul %10, %12, %cst_13 {dimension_numbers = #tpu.dot_dimension_numbers<[1], [0], [0], [1], [0, 0, 1, 1], [], []>} : vector<16x64xbf16>, vector<64x128xbf16>, vector<16x128xf32> -> vector<16x128xf32>
    %14 = arith.addf %8, %13 : vector<16x128xf32>
    %c1_14 = arith.constant 1 : index
    %c0_15 = arith.constant 0 : index
    %15 = vector.load %arg8[%c1_14, %c0_15] : memref<18x64xf32, #tpu.memory_space<vmem>>, vector<16x64xf32>
    %16 = arith.truncf %15 : vector<16x64xf32> to vector<16x64xbf16>
    %c1_16 = arith.constant 1 : index
    %c0_17 = arith.constant 0 : index
    %c0_18 = arith.constant 0 : index
    %17 = vector.load %arg2[%c1_16, %c0_17, %c0_18] : memref<3x64x128xbf16, #tpu.memory_space<vmem>>, vector<1x64x128xbf16>
    %18 = vector.shape_cast %17 : vector<1x64x128xbf16> to vector<64x128xbf16>
    %cst_19 = arith.constant dense<0.000000e+00> : vector<16x128xf32>
    %19 = tpu.matmul %16, %18, %cst_19 {dimension_numbers = #tpu.dot_dimension_numbers<[1], [0], [0], [1], [0, 0, 1, 1], [], []>} : vector<16x64xbf16>, vector<64x128xbf16>, vector<16x128xf32> -> vector<16x128xf32>
    %20 = arith.addf %14, %19 : vector<16x128xf32>
    %c2 = arith.constant 2 : index
    %c0_20 = arith.constant 0 : index
    %21 = vector.load %arg8[%c2, %c0_20] : memref<18x64xf32, #tpu.memory_space<vmem>>, vector<16x64xf32>
    %22 = arith.truncf %21 : vector<16x64xf32> to vector<16x64xbf16>
    %c2_21 = arith.constant 2 : index
    %c0_22 = arith.constant 0 : index
    %c0_23 = arith.constant 0 : index
    %23 = vector.load %arg2[%c2_21, %c0_22, %c0_23] : memref<3x64x128xbf16, #tpu.memory_space<vmem>>, vector<1x64x128xbf16>
    %24 = vector.shape_cast %23 : vector<1x64x128xbf16> to vector<64x128xbf16>
    %cst_24 = arith.constant dense<0.000000e+00> : vector<16x128xf32>
    %25 = tpu.matmul %22, %24, %cst_24 {dimension_numbers = #tpu.dot_dimension_numbers<[1], [0], [0], [1], [0, 0, 1, 1], [], []>} : vector<16x64xbf16>, vector<64x128xbf16>, vector<16x128xf32> -> vector<16x128xf32>
    %26 = arith.addf %20, %25 : vector<16x128xf32>
    %c0_25 = arith.constant 0 : index
    %c0_26 = arith.constant 0 : index
    %27 = vector.load %arg3[%c0_25, %c0_26] : memref<1x128xf32, #tpu.memory_space<vmem>>, vector<1x128xf32>
    %28 = vector.broadcast %27 : vector<1x128xf32> to vector<16x128xf32>
    %29 = arith.addf %26, %28 : vector<16x128xf32>
    %cst_27 = arith.constant 0.000000e+00 : f32
    %30 = vector.broadcast %cst_27 : f32 to vector<16x128xf32>
    %31 = arith.maximumf %29, %30 : vector<16x128xf32>
    %cst_28 = arith.constant 0.000000e+00 : f32
    %32 = vector.broadcast %cst_28 : f32 to vector<1x128xf32>
    %c0_29 = arith.constant 0 : index
    %c0_30 = arith.constant 0 : index
    %33 = vector.load %arg9[%c0_29, %c0_30] : memref<18x128xf32, #tpu.memory_space<vmem>>, vector<1x128xf32>
    tpu.vector_store %arg9[%c0_29, %c0_30], %32 {strides = array<i32>} : memref<18x128xf32, #tpu.memory_space<vmem>>, vector<1x128xf32>,
    %cst_31 = arith.constant 0.000000e+00 : f32
    %34 = vector.broadcast %cst_31 : f32 to vector<1x128xf32>
    %c17_32 = arith.constant 17 : index
    %c0_33 = arith.constant 0 : index
    %35 = vector.load %arg9[%c17_32, %c0_33] : memref<18x128xf32, #tpu.memory_space<vmem>>, vector<1x128xf32>
    tpu.vector_store %arg9[%c17_32, %c0_33], %34 {strides = array<i32>} : memref<18x128xf32, #tpu.memory_space<vmem>>, vector<1x128xf32>,
    %c1_34 = arith.constant 1 : index
    %c0_35 = arith.constant 0 : index
    %36 = vector.load %arg9[%c1_34, %c0_35] : memref<18x128xf32, #tpu.memory_space<vmem>>, vector<16x128xf32>
    tpu.vector_store %arg9[%c1_34, %c0_35], %31 {strides = array<i32>} : memref<18x128xf32, #tpu.memory_space<vmem>>, vector<16x128xf32>,
    %cst_36 = arith.constant 0.000000e+00 : f32
    %37 = vector.broadcast %cst_36 : f32 to vector<16x128xf32>
    %c0_37 = arith.constant 0 : index
    %c0_38 = arith.constant 0 : index
    %38 = vector.load %arg9[%c0_37, %c0_38] : memref<18x128xf32, #tpu.memory_space<vmem>>, vector<16x128xf32>
    %39 = arith.truncf %38 : vector<16x128xf32> to vector<16x128xbf16>
    %c0_39 = arith.constant 0 : index
    %c0_40 = arith.constant 0 : index
    %c0_41 = arith.constant 0 : index
    %40 = vector.load %arg4[%c0_39, %c0_40, %c0_41] : memref<3x128x128xbf16, #tpu.memory_space<vmem>>, vector<1x128x128xbf16>
    %41 = vector.shape_cast %40 : vector<1x128x128xbf16> to vector<128x128xbf16>
    %cst_42 = arith.constant dense<0.000000e+00> : vector<16x128xf32>
    %42 = tpu.matmul %39, %41, %cst_42 {dimension_numbers = #tpu.dot_dimension_numbers<[1], [0], [0], [1], [0, 0, 1, 1], [], []>} : vector<16x128xbf16>, vector<128x128xbf16>, vector<16x128xf32> -> vector<16x128xf32>
    %43 = arith.addf %37, %42 : vector<16x128xf32>
    %c1_43 = arith.constant 1 : index
    %c0_44 = arith.constant 0 : index
    %44 = vector.load %arg9[%c1_43, %c0_44] : memref<18x128xf32, #tpu.memory_space<vmem>>, vector<16x128xf32>
    %45 = arith.truncf %44 : vector<16x128xf32> to vector<16x128xbf16>
    %c1_45 = arith.constant 1 : index
    %c0_46 = arith.constant 0 : index
    %c0_47 = arith.constant 0 : index
    %46 = vector.load %arg4[%c1_45, %c0_46, %c0_47] : memref<3x128x128xbf16, #tpu.memory_space<vmem>>, vector<1x128x128xbf16>
    %47 = vector.shape_cast %46 : vector<1x128x128xbf16> to vector<128x128xbf16>
    %cst_48 = arith.constant dense<0.000000e+00> : vector<16x128xf32>
    %48 = tpu.matmul %45, %47, %cst_48 {dimension_numbers = #tpu.dot_dimension_numbers<[1], [0], [0], [1], [0, 0, 1, 1], [], []>} : vector<16x128xbf16>, vector<128x128xbf16>, vector<16x128xf32> -> vector<16x128xf32>
    %49 = arith.addf %43, %48 : vector<16x128xf32>
    %c2_49 = arith.constant 2 : index
    %c0_50 = arith.constant 0 : index
    %50 = vector.load %arg9[%c2_49, %c0_50] : memref<18x128xf32, #tpu.memory_space<vmem>>, vector<16x128xf32>
    %51 = arith.truncf %50 : vector<16x128xf32> to vector<16x128xbf16>
    %c2_51 = arith.constant 2 : index
    %c0_52 = arith.constant 0 : index
    %c0_53 = arith.constant 0 : index
    %52 = vector.load %arg4[%c2_51, %c0_52, %c0_53] : memref<3x128x128xbf16, #tpu.memory_space<vmem>>, vector<1x128x128xbf16>
    %53 = vector.shape_cast %52 : vector<1x128x128xbf16> to vector<128x128xbf16>
    %cst_54 = arith.constant dense<0.000000e+00> : vector<16x128xf32>
    %54 = tpu.matmul %51, %53, %cst_54 {dimension_numbers = #tpu.dot_dimension_numbers<[1], [0], [0], [1], [0, 0, 1, 1], [], []>} : vector<16x128xbf16>, vector<128x128xbf16>, vector<16x128xf32> -> vector<16x128xf32>
    %55 = arith.addf %49, %54 : vector<16x128xf32>
    %c0_55 = arith.constant 0 : index
    %c0_56 = arith.constant 0 : index
    %c0_57 = arith.constant 0 : index
    %56 = vector.load %arg1[%c0_55, %c0_56, %c0_57] : memref<1x16x64xbf16, #tpu.memory_space<vmem>>, vector<1x16x64xbf16>
    %57 = vector.shape_cast %56 : vector<1x16x64xbf16> to vector<16x64xbf16>
    %c0_58 = arith.constant 0 : index
    %c0_59 = arith.constant 0 : index
    %58 = vector.load %arg5[%c0_58, %c0_59] : memref<64x128xbf16, #tpu.memory_space<vmem>>, vector<64x128xbf16>
    %cst_60 = arith.constant dense<0.000000e+00> : vector<16x128xf32>
    %59 = tpu.matmul %57, %58, %cst_60 {dimension_numbers = #tpu.dot_dimension_numbers<[1], [0], [0], [1], [0, 0, 1, 1], [], []>} : vector<16x64xbf16>, vector<64x128xbf16>, vector<16x128xf32> -> vector<16x128xf32>
    %60 = arith.addf %55, %59 : vector<16x128xf32>
    %c0_61 = arith.constant 0 : index
    %c0_62 = arith.constant 0 : index
    %61 = vector.load %arg6[%c0_61, %c0_62] : memref<1x128xf32, #tpu.memory_space<vmem>>, vector<1x128xf32>
    %62 = vector.broadcast %61 : vector<1x128xf32> to vector<16x128xf32>
    %63 = arith.addf %60, %62 : vector<16x128xf32>
    %cst_63 = arith.constant 0.000000e+00 : f32
    %64 = vector.broadcast %cst_63 : f32 to vector<16x128xf32>
    %65 = arith.maximumf %63, %64 : vector<16x128xf32>
    %66 = vector.shape_cast %65 : vector<16x128xf32> to vector<1x16x128xf32>
    %c0_64 = arith.constant 0 : index
    %c0_65 = arith.constant 0 : index
    %c0_66 = arith.constant 0 : index
    %67 = vector.load %arg7[%c0_64, %c0_65, %c0_66] : memref<1x16x128xf32, #tpu.memory_space<vmem>>, vector<1x16x128xf32>
    tpu.vector_store %arg7[%c0_64, %c0_65, %c0_66], %66 {strides = array<i32>} : memref<1x16x128xf32, #tpu.memory_space<vmem>>, vector<1x16x128xf32>,
    return
  }
  func.func @transform_0(%arg0: i32) -> (i32, i32, i32) {
    %c0_i32 = arith.constant 0 : i32
    %c0_i32_0 = arith.constant 0 : i32
    %c0_i32_1 = arith.constant 0 : i32
    return %arg0, %c0_i32, %c0_i32_0 : i32, i32, i32
  }
  func.func @transform_1(%arg0: i32) -> (i32, i32, i32) {
    %c0_i32 = arith.constant 0 : i32
    %c0_i32_0 = arith.constant 0 : i32
    %c0_i32_1 = arith.constant 0 : i32
    %c0_i32_2 = arith.constant 0 : i32
    return %c0_i32, %c0_i32_0, %c0_i32_1 : i32, i32, i32
  }
  func.func @transform_2(%arg0: i32) -> (i32, i32) {
    %c0_i32 = arith.constant 0 : i32
    %c0_i32_0 = arith.constant 0 : i32
    %c0_i32_1 = arith.constant 0 : i32
    return %c0_i32, %c0_i32_0 : i32, i32
  }
  func.func @transform_3(%arg0: i32) -> (i32, i32, i32) {
    %c0_i32 = arith.constant 0 : i32
    %c0_i32_0 = arith.constant 0 : i32
    %c0_i32_1 = arith.constant 0 : i32
    %c0_i32_2 = arith.constant 0 : i32
    return %c0_i32, %c0_i32_0, %c0_i32_1 : i32, i32, i32
  }
  func.func @transform_4(%arg0: i32) -> (i32, i32) {
    %c0_i32 = arith.constant 0 : i32
    %c0_i32_0 = arith.constant 0 : i32
    %c0_i32_1 = arith.constant 0 : i32
    return %c0_i32, %c0_i32_0 : i32, i32
  }
  func.func @transform_5(%arg0: i32) -> (i32, i32) {
    %c0_i32 = arith.constant 0 : i32
    %c0_i32_0 = arith.constant 0 : i32
    %c0_i32_1 = arith.constant 0 : i32
    return %c0_i32, %c0_i32_0 : i32, i32
  }
  func.func @transform_6(%arg0: i32) -> (i32, i32, i32) {
    %c0_i32 = arith.constant 0 : i32
    %c0_i32_0 = arith.constant 0 : i32
    %c0_i32_1 = arith.constant 0 : i32
    return %arg0, %c0_i32, %c0_i32_0 : i32, i32, i32
  }
}

</mosaic_0001>

<llo_original>
// kernel: tpu_custom_call.1
$region0: #{tpu_custom_call.1}
  #allocation0 [shape = 'u32[]', space=smem, size = 0x4, offset = 0x4, fixed_abs, tag = 'smem constant byte address 0x4 - core index']
  #allocation1 [shape = 'u32[144,128]{1,0:T(1,128)}', space=vmem, size = 0x12000, scoped, tag = 'internal scratch']
  #allocation2 [shape = 'f32[18,64]{1,0:T(8,128)}', space=vmem, size = 0x3000, scoped, tag = 'scratch operand']
  #allocation3 [shape = 'f32[18,128]{1,0:T(8,128)}', space=vmem, size = 0x3000, scoped, tag = 'scratch operand']
  %s0 = inlined_call_operand.hbm [shape: bf16[2,16,64], index: 0, kind: input, shape index: {}]
  %s1 = inlined_call_operand.hbm [shape: bf16[3,64,128], index: 1, kind: input, shape index: {}]
  %s2 = inlined_call_operand.vmem [shape: f32[1,128], index: 2, kind: input, shape index: {}]
  %s3 = inlined_call_operand.hbm [shape: bf16[3,128,128], index: 3, kind: input, shape index: {}]
  %s4 = inlined_call_operand.hbm [shape: bf16[64,128], index: 4, kind: input, shape index: {}]
  %s5 = inlined_call_operand.vmem [shape: f32[1,128], index: 5, kind: input, shape index: {}]
  %s6 = inlined_call_operand.hbm [shape: f32[2,16,128], index: 6, kind: output, shape index: {}]
  %s7 = sld [smem:[#allocation0]]
  $region73: #{tpu_custom_call.1} parent=0
    _
  %s9 = ssub.s32 1, %s7
  %s10 = scalar_select 0, %s9, %s7
  $region1: #{tpu_custom_call.1} parent=0
    #allocation4 [shape = 'u8[8192]{0}', space=vmem, size = 0x2000, scoped, tag = 'input window, operand 0']
    #allocation5 [shape = 's32[2]{0}', space=sflag, size = 0x8, scoped, tag = 'scoped memory for tpu_custom_call.1']
    #allocation6 [shape = 's32[2]{0}', space=sflag, size = 0x8, scoped, tag = 'scoped memory for tpu_custom_call.1']
    #allocation7 [shape = 'u8[49152]{0}', space=vmem, size = 0xc000, scoped, tag = 'input window, operand 1, single buffered']
    #allocation8 [shape = 's32[1]{0}', space=sflag, size = 0x4, scoped, tag = 'scoped memory for tpu_custom_call.1']
    #allocation9 [shape = 'u8[98304]{0}', space=vmem, size = 0x18000, scoped, tag = 'input window, operand 3, single buffered']
    #allocation10 [shape = 'u8[16384]{0}', space=vmem, size = 0x4000, scoped, tag = 'input window, operand 4, single buffered']
    #allocation11 [shape = 's32[1]{0}', space=sflag, size = 0x4, scoped, tag = 'scoped memory for tpu_custom_call.1']
    #allocation12 [shape = 'u8[16384]{0}', space=vmem, size = 0x4000, scoped, tag = 'output window, operand 0']
    %11 = vsyncpa [#allocation5], 0
    %s12 = scalar_lea.sflag [#allocation5], 1
    %13 = vsyncpa %s12, 0
    %14 = vsyncpa [#allocation8], 0
    %15 = vsyncpa [#allocation11], 0
    %16 = vsyncpa [#allocation6], 0
    %s17 = scalar_lea.sflag [#allocation6], 1
    %18 = vsyncpa %s17, 0
    loop: start=0, step=1, limit=4
    $region2: #{tpu_custom_call.1} parent=1 // loop_pre_header
      _
    $region3: #{tpu_custom_call.1} parent=1 // loop_header
      %s20 = sphi 0, %s24
      %p21 = scmp.ge.s32.totalorder %s20, 4
      %s30 = sphi 0, %s32
      %s33 = sphi 0, %s30
      %s34 = sphi 0, %s33
      %s50 = sphi 0, %s34
      %s54 = sphi 0, %s54
      %s56 = sphi 0, %s54
      %s57 = sphi 0, %s56
      %s71 = sphi 0, %s57
      %s75 = sphi 0, %s75
      %s77 = sphi 0, %s75
      %s78 = sphi 0, %s77
      %s92 = sphi 0, %s78
      %s96 = sphi 0, %s96
      %s98 = sphi 0, %s96
      %s99 = sphi 0, %s98
      %s113 = sphi 0, %s99
      %s117 = sphi 0, %s117
      %s119 = sphi 0, %s117
      %s120 = sphi 0, %s119
      %s134 = sphi 0, %s120
      %s138 = sphi 0, %s138
      %s140 = sphi 0, %s138
      %s141 = sphi 0, %s140
      %s155 = sphi 0, %s141
      %s161 = sphi 0, %s163
      %s164 = sphi 0, %s161
      %s165 = sphi 0, %s164
      %s181 = sphi 0, %s165
    $region4: #{tpu_custom_call.1} parent=1 // loop_header_branch
      %23 = sbr.rel (%p21) target = $region8
    $region5: #{tpu_custom_call.1} parent=1 // loop_body
      %s25 = ssub.s32 %s20, 1
      %s26 = ssub.s32 %s20, 2
      %s27 = sadd.s32 %s20, 1
      %s28 = ssub.s32 %s20, %s27
      %p29 = scmp.eq.s32.totalorder %s28, 0
      %s31 = sadd.s32 %s30, 1
      %s32 = scalar_select %p29, %s30, %s31
      %p35 = pneg %p29
      %p36 = scmp.eq.s32.totalorder %s20, 1
      %p37 = por %p35, %p36
      %p38 = scmp.ne.s32.totalorder %s30, %s33
      %p39 = scmp.eq.s32.totalorder %s20, 0
      %p40 = por %p38, %p39
      %p41 = scmp.ne.s32.totalorder %s30, %s33
      %p42 = scmp.eq.s32.totalorder %s25, 1
      %p43 = por %p41, %p42
      %p44 = scmp.ne.s32.totalorder %s33, %s34
      %p45 = scmp.eq.s32.totalorder %s25, 0
      %p46 = por %p44, %p45
      %p47 = scmp.ne.s32.totalorder %s33, %s34
      %p48 = scmp.eq.s32.totalorder %s26, 1
      %p49 = por %p47, %p48
      %p51 = scmp.ne.s32.totalorder %s34, %s50
      %p52 = scmp.eq.s32.totalorder %s26, 0
      %p53 = por %p51, %p52
      %s55 = sadd.s32 %s54, 1
      %p58 = scmp.eq.s32.totalorder %s20, 1
      %p59 = scmp.ne.s32.totalorder %s54, %s56
      %p60 = scmp.eq.s32.totalorder %s20, 0
      %p61 = por %p59, %p60
      %p62 = scmp.ne.s32.totalorder %s54, %s56
      %p63 = scmp.eq.s32.totalorder %s25, 1
      %p64 = por %p62, %p63
      %p65 = scmp.ne.s32.totalorder %s56, %s57
      %p66 = scmp.eq.s32.totalorder %s25, 0
      %p67 = por %p65, %p66
      %p68 = scmp.ne.s32.totalorder %s56, %s57
      %p69 = scmp.eq.s32.totalorder %s26, 1
      %p70 = por %p68, %p69
      %p72 = scmp.ne.s32.totalorder %s57, %s71
      %p73 = scmp.eq.s32.totalorder %s26, 0
      %p74 = por %p72, %p73
      %s76 = sadd.s32 %s75, 1
      %p79 = scmp.eq.s32.totalorder %s20, 1
      %p80 = scmp.ne.s32.totalorder %s75, %s77
      %p81 = scmp.eq.s32.totalorder %s20, 0
      %p82 = por %p80, %p81
      %p83 = scmp.ne.s32.totalorder %s75, %s77
      %p84 = scmp.eq.s32.totalorder %s25, 1
      %p85 = por %p83, %p84
      %p86 = scmp.ne.s32.totalorder %s77, %s78
      %p87 = scmp.eq.s32.totalorder %s25, 0
      %p88 = por %p86, %p87
      %p89 = scmp.ne.s32.totalorder %s77, %s78
      %p90 = scmp.eq.s32.totalorder %s26, 1
      %p91 = por %p89, %p90
      %p93 = scmp.ne.s32.totalorder %s78, %s92
      %p94 = scmp.eq.s32.totalorder %s26, 0
      %p95 = por %p93, %p94
      %s97 = sadd.s32 %s96, 1
      %p100 = scmp.eq.s32.totalorder %s20, 1
      %p101 = scmp.ne.s32.totalorder %s96, %s98
      %p102 = scmp.eq.s32.totalorder %s20, 0
      %p103 = por %p101, %p102
      %p104 = scmp.ne.s32.totalorder %s96, %s98
      %p105 = scmp.eq.s32.totalorder %s25, 1
      %p106 = por %p104, %p105
      %p107 = scmp.ne.s32.totalorder %s98, %s99
      %p108 = scmp.eq.s32.totalorder %s25, 0
      %p109 = por %p107, %p108
      %p110 = scmp.ne.s32.totalorder %s98, %s99
      %p111 = scmp.eq.s32.totalorder %s26, 1
      %p112 = por %p110, %p111
      %p114 = scmp.ne.s32.totalorder %s99, %s113
      %p115 = scmp.eq.s32.totalorder %s26, 0
      %p116 = por %p114, %p115
      %s118 = sadd.s32 %s117, 1
      %p121 = scmp.eq.s32.totalorder %s20, 1
      %p122 = scmp.ne.s32.totalorder %s117, %s119
      %p123 = scmp.eq.s32.totalorder %s20, 0
      %p124 = por %p122, %p123
      %p125 = scmp.ne.s32.totalorder %s117, %s119
      %p126 = scmp.eq.s32.totalorder %s25, 1
      %p127 = por %p125, %p126
      %p128 = scmp.ne.s32.totalorder %s119, %s120
      %p129 = scmp.eq.s32.totalorder %s25, 0
      %p130 = por %p128, %p129
      %p131 = scmp.ne.s32.totalorder %s119, %s120
      %p132 = scmp.eq.s32.totalorder %s26, 1
      %p133 = por %p131, %p132
      %p135 = scmp.ne.s32.totalorder %s120, %s134
      %p136 = scmp.eq.s32.totalorder %s26, 0
      %p137 = por %p135, %p136
      %s139 = sadd.s32 %s138, 1
      %p142 = scmp.eq.s32.totalorder %s20, 1
      %p143 = scmp.ne.s32.totalorder %s138, %s140
      %p144 = scmp.eq.s32.totalorder %s20, 0
      %p145 = por %p143, %p144
      %p146 = scmp.ne.s32.totalorder %s138, %s140
      %p147 = scmp.eq.s32.totalorder %s25, 1
      %p148 = por %p146, %p147
      %p149 = scmp.ne.s32.totalorder %s140, %s141
      %p150 = scmp.eq.s32.totalorder %s25, 0
      %p151 = por %p149, %p150
      %p152 = scmp.ne.s32.totalorder %s140, %s141
      %p153 = scmp.eq.s32.totalorder %s26, 1
      %p154 = por %p152, %p153
      %p156 = scmp.ne.s32.totalorder %s141, %s155
      %p157 = scmp.eq.s32.totalorder %s26, 0
      %p158 = por %p156, %p157
      %s159 = ssub.s32 %s20, %s27
      %p160 = scmp.eq.s32.totalorder %s159, 0
      %s162 = sadd.s32 %s161, 1
      %s163 = scalar_select %p160, %s161, %s162
      %p166 = pneg %p160
      %p167 = scmp.eq.s32.totalorder %s20, 1
      %p168 = por %p166, %p167
      %p169 = scmp.ne.s32.totalorder %s161, %s164
      %p170 = scmp.eq.s32.totalorder %s20, 0
      %p171 = por %p169, %p170
      %p172 = scmp.ne.s32.totalorder %s161, %s164
      %p173 = scmp.eq.s32.totalorder %s25, 1
      %p174 = por %p172, %p173
      %p175 = scmp.ne.s32.totalorder %s164, %s165
      %p176 = scmp.eq.s32.totalorder %s25, 0
      %p177 = por %p175, %p176
      %p178 = scmp.ne.s32.totalorder %s164, %s165
      %p179 = scmp.eq.s32.totalorder %s26, 1
      %p180 = por %p178, %p179
      %p182 = scmp.ne.s32.totalorder %s165, %s181
      %p183 = scmp.eq.s32.totalorder %s26, 0
      %p184 = por %p182, %p183
      %p185 = scmp.le.s32.totalorder 1, %s20
      %p186 = scmp.lt.s32.totalorder %s20, 3
      %p187 = pnand %p185, %p186
      %p188 = pneg %p187
      // Predicated region
      $region9: #{tpu_custom_call.1} parent=5 // pred_check
        _
      $region10: #{tpu_custom_call.1} parent=5 // pred_check_branch
        %190 = sbr.rel (%p187) target = $region12
      $region11: #{tpu_custom_call.1} parent=5 // pred_region
        %s191 = ssub.s32 %s20, 1
        // Predicated region
        $region13: #{tpu_custom_call.1} parent=11 // pred_check
          %p192 = pneg %p67
        $region14: #{tpu_custom_call.1} parent=11 // pred_check_branch
          %194 = sbr.rel (%p192) target = $region16
        $region15: #{tpu_custom_call.1} parent=11 // pred_region
          %s196 = ssub.s32 1536, 1536
          %197 = vsyncadd [#allocation8], %s196
          %s198 = sshll.u32 [#allocation7], 4
          %s199 = int_to_ptr.vmem [resolvable:$true] %s198
          %204 = dma.hbm_to_vmem [thread:$0]  %s1, 1536, %s199, [#allocation8], 64, 64, 4
        $region16: #{tpu_custom_call.1} parent=11 // pred_fallthru
          _
        // Predicated region
        $region17: #{tpu_custom_call.1} parent=11 // pred_check
          %p205 = pneg %p88
        $region18: #{tpu_custom_call.1} parent=11 // pred_check_branch
          %207 = sbr.rel (%p205) target = $region20
        $region19: #{tpu_custom_call.1} parent=11 // pred_region
          _
        $region20: #{tpu_custom_call.1} parent=11 // pred_fallthru
          _
        // Predicated region
        $region21: #{tpu_custom_call.1} parent=11 // pred_check
          %p208 = pneg %p109
        $region22: #{tpu_custom_call.1} parent=11 // pred_check_branch
          %210 = sbr.rel (%p208) target = $region24
        $region23: #{tpu_custom_call.1} parent=11 // pred_region
          %s212 = ssub.s32 3072, 3072
          %213 = vsyncadd [#allocation8], %s212
          %s214 = sshll.u32 [#allocation9], 4
          %s215 = int_to_ptr.vmem [resolvable:$true] %s214
          %220 = dma.hbm_to_vmem [thread:$0]  %s3, 3072, %s215, [#allocation8], 64, 64, 4
        $region24: #{tpu_custom_call.1} parent=11 // pred_fallthru
          _
        // Predicated region
        $region25: #{tpu_custom_call.1} parent=11 // pred_check
          %p221 = pneg %p130
        $region26: #{tpu_custom_call.1} parent=11 // pred_check_branch
          %223 = sbr.rel (%p221) target = $region28
        $region27: #{tpu_custom_call.1} parent=11 // pred_region
          %s225 = ssub.s32 512, 512
          %226 = vsyncadd [#allocation11], %s225
          %s227 = sshll.u32 [#allocation10], 4
          %s228 = int_to_ptr.vmem [resolvable:$true] %s227
          %233 = dma.hbm_to_vmem [thread:$0]  %s4, 512, %s228, [#allocation11], 64, 64, 4
        $region28: #{tpu_custom_call.1} parent=11 // pred_fallthru
          _
        // Predicated region
        $region29: #{tpu_custom_call.1} parent=11 // pred_check
          %p234 = pneg %p151
        $region30: #{tpu_custom_call.1} parent=11 // pred_check_branch
          %236 = sbr.rel (%p234) target = $region32
        $region31: #{tpu_custom_call.1} parent=11 // pred_region
          _
        $region32: #{tpu_custom_call.1} parent=11 // pred_fallthru
          _
      $region12: #{tpu_custom_call.1} parent=5 // pred_fallthru
        _
      %p237 = scmp.lt.s32.totalorder %s20, 2
      // Predicated region
      $region33: #{tpu_custom_call.1} parent=5 // pred_check
        %p238 = pneg %p237
      $region34: #{tpu_custom_call.1} parent=5 // pred_check_branch
        %240 = sbr.rel (%p238) target = $region36
      $region35: #{tpu_custom_call.1} parent=5 // pred_region
        // Predicated region
        $region37: #{tpu_custom_call.1} parent=35 // pred_check
          %p241 = pneg %p40
        $region38: #{tpu_custom_call.1} parent=35 // pred_check_branch
          %243 = sbr.rel (%p241) target = $region40
        $region39: #{tpu_custom_call.1} parent=35 // pred_region
          %s244 = sand.u32 %s30, 1
          %s245 = scalar_lea.sflag [#allocation5], %s244
          %s246 = sand.u32 %s30, 1
          %s247 = smul.addr %s246, 8
          %s248 = scalar_lea.vmem [#allocation4], %s247
          %s250 = ssub.s32 128, 128
          %251 = vsyncadd %s245, %s250
          %s252 = smul.addr %s20, 2
          %s253 = smul.addr %s252, 64
          %s254 = scalar_lea.hbm %s0, %s253
          %s255 = sshll.u32 %s248, 4
          %s256 = int_to_ptr.vmem [resolvable:$true] %s255
          %261 = dma.hbm_to_vmem [thread:$0]  %s254, 128, %s256, %s245, 64, 64, 4
        $region40: #{tpu_custom_call.1} parent=35 // pred_fallthru
          _
      $region36: #{tpu_custom_call.1} parent=5 // pred_fallthru
        _
      %p262 = scmp.le.s32.totalorder 1, %s20
      %p263 = scmp.lt.s32.totalorder %s20, 3
      %p264 = pnand %p262, %p263
      %p265 = pneg %p264
      // Predicated region
      $region41: #{tpu_custom_call.1} parent=5 // pred_check
        _
      $region42: #{tpu_custom_call.1} parent=5 // pred_check_branch
        %267 = sbr.rel (%p264) target = $region44
      $region43: #{tpu_custom_call.1} parent=5 // pred_region
        %s268 = ssub.s32 %s20, 1
        %s269 = sand.u32 %s33, 1
        %s270 = scalar_lea.sflag [#allocation5], %s269
        %s271 = sand.u32 %s33, 1
        %s272 = smul.addr %s271, 8
        %s273 = scalar_lea.vmem [#allocation4], %s272
        // Predicated region
        $region45: #{tpu_custom_call.1} parent=43 // pred_check
          %p274 = pneg %p46
        $region46: #{tpu_custom_call.1} parent=43 // pred_check_branch
          %276 = sbr.rel (%p274) target = $region48
        $region47: #{tpu_custom_call.1} parent=43 // pred_region
          %277 = dma.done %s270, 128
        $region48: #{tpu_custom_call.1} parent=43 // pred_fallthru
          _
        // Predicated region
        $region49: #{tpu_custom_call.1} parent=43 // pred_check
          %p278 = pneg %p67
        $region50: #{tpu_custom_call.1} parent=43 // pred_check_branch
          %280 = sbr.rel (%p278) target = $region52
        $region51: #{tpu_custom_call.1} parent=43 // pred_region
          %281 = dma.done [#allocation8], 1536
        $region52: #{tpu_custom_call.1} parent=43 // pred_fallthru
          _
        // Predicated region
        $region53: #{tpu_custom_call.1} parent=43 // pred_check
          %p282 = pneg %p109
        $region54: #{tpu_custom_call.1} parent=43 // pred_check_branch
          %284 = sbr.rel (%p282) target = $region56
        $region55: #{tpu_custom_call.1} parent=43 // pred_region
          %285 = dma.done [#allocation8], 3072
        $region56: #{tpu_custom_call.1} parent=43 // pred_fallthru
          _
        // Predicated region
        $region57: #{tpu_custom_call.1} parent=43 // pred_check
          %p286 = pneg %p130
        $region58: #{tpu_custom_call.1} parent=43 // pred_check_branch
          %288 = sbr.rel (%p286) target = $region60
        $region59: #{tpu_custom_call.1} parent=43 // pred_region
          %289 = dma.done [#allocation11], 512
        $region60: #{tpu_custom_call.1} parent=43 // pred_fallthru
          _
        %s290 = sand.u32 %s33, 1
        %s291 = scalar_lea.sflag [#allocation5], %s290
        %s292 = sand.u32 %s33, 1
        %s293 = smul.addr %s292, 8
        %s294 = scalar_lea.vmem [#allocation4], %s293
        %p295 = pneg %p46
        %p296 = pneg %p43
        %p297 = pneg %p67
        %p298 = pneg %p64
        %p299 = pneg %p88
        %p300 = pneg %p85
        %p301 = pneg %p109
        %p302 = pneg %p106
        %p303 = pneg %p130
        %p304 = pneg %p127
        %p305 = pneg %p151
        %p306 = pneg %p148
        %p307 = pneg %p177
        %p308 = pneg %p174
        %s309 = sand.u32 %s164, 1
        %s310 = scalar_lea.sflag [#allocation6], %s309
        %s311 = sand.u32 %s164, 1
        %s312 = smul.addr %s311, 16
        %s313 = scalar_lea.vmem [#allocation12], %s312
        %vm315 = vcmask 516096
        %316 = vst.msk [vmem:[#allocation2] sm:$0x1] %vm315, 0.0
        %317 = vst.msk [vmem:[#allocation2 + $0x11] sm:$0x1] %vm315, 0.0
        %v318 = vld [vmem:[%s273] sm:$0xf]
        %v319 = vld [vmem:[%s273 + $0x4] sm:$0xf]
        %v320 = vunpack.c.l.bf16 %v318
        %v321 = vunpack.c.l.bf16 %v319
        %vm322 = vcmask 523264
        %323 = vst.msk [vmem:[#allocation2 + $0x1] sm:$0xff] %vm322, %v320
        %324 = vst.msk [vmem:[#allocation2 + $0x9] sm:$0xff] %vm322, %v321
        %v325 = vld [vmem:[#allocation2] sm:$0xff]
        %v326 = vld [vmem:[#allocation2 + $0x8] sm:$0xff]
        %v327 = vpack.c.bf16 %v326, %v325
        %v328 = vld [vmem:[#allocation7] sm:$0xf]
        %v329 = vld [vmem:[#allocation7 + $0x4] sm:$0xf]
        %v330 = vld [vmem:[#allocation7 + $0x8] sm:$0xf]
        %v331 = vld [vmem:[#allocation7 + $0xc] sm:$0xf]
        %v332 = vld [vmem:[#allocation7 + $0x10] sm:$0xf]
        %v333 = vld [vmem:[#allocation7 + $0x14] sm:$0xf]
        %v334 = vld [vmem:[#allocation7 + $0x18] sm:$0xf]
        %v335 = vld [vmem:[#allocation7 + $0x1c] sm:$0xf]
        %v336 = vld [vmem:[#allocation2 + $0x1] sm:$0xff]
        %v337 = vld [vmem:[#allocation2 + $0x9] sm:$0xff]
        %v338 = vpack.c.bf16 %v337, %v336
        %s339 = scalar_lea.vmem [#allocation7], 32
        %v340 = vld [vmem:[%s339] sm:$0xf]
        %v341 = vld [vmem:[%s339 + $0x4] sm:$0xf]
        %v342 = vld [vmem:[%s339 + $0x8] sm:$0xf]
        %v343 = vld [vmem:[%s339 + $0xc] sm:$0xf]
        %v344 = vld [vmem:[%s339 + $0x10] sm:$0xf]
        %v345 = vld [vmem:[%s339 + $0x14] sm:$0xf]
        %v346 = vld [vmem:[%s339 + $0x18] sm:$0xf]
        %v347 = vld [vmem:[%s339 + $0x1c] sm:$0xf]
        %v356 = vunpack.c.l.b16 %v340
        %v357 = vunpack.c.l.b16 %v341
        %v358 = vunpack.c.l.b16 %v342
        %v359 = vunpack.c.l.b16 %v343
        %v360 = vunpack.c.l.b16 %v344
        %v361 = vunpack.c.l.b16 %v345
        %v362 = vunpack.c.l.b16 %v346
        %v363 = vunpack.c.l.b16 %v347
        %v364 = vpack.c.b16 %v357, %v356
        %v365 = vpack.c.b16 %v359, %v358
        %v366 = vpack.c.b16 %v361, %v360
        %v367 = vpack.c.b16 %v363, %v362
        %v373 = vsel %vm322, %v338, 0
        %375 = vmatprep.subr.bf16.mxu0 0
        %376 = vmatpush1.bf16.msra.mxu0 %v364
        %377 = vmatprep.subr.bf16.mxu0 0
        %378 = vmatpush1.bf16.msra.mxu0 %v365
        %379 = vmatprep.subr.bf16.mxu0 0
        %380 = vmatpush1.bf16.msra.mxu0 %v366
        %381 = vmatprep.subr.bf16.mxu0 0
        %382 = vmatpush1.bf16.msra.mxu0 %v367
        %383 = vmatprep.subr.bf16.mxu0 0
        %384 = vmatpush1.bf16.msra.mxu0 0
        %385 = vmatprep.subr.bf16.mxu0 0
        %386 = vmatpush1.bf16.msra.mxu0 0
        %387 = vmatprep.subr.bf16.mxu0 0
        %388 = vmatpush1.bf16.msra.mxu0 0
        %389 = vmatprep.subr.bf16.mxu0 0
        %390 = vmatpush1.bf16.msra.mxu0 0
        %391 = vmatprep.subr.bf16.mxu0 0
        %392 = vmatpush1.bf16.msra.mxu0 0
        %393 = vmatprep.subr.bf16.mxu0 0
        %394 = vmatpush1.bf16.msra.mxu0 0
        %395 = vmatprep.subr.bf16.mxu0 0
        %396 = vmatpush1.bf16.msra.mxu0 0
        %397 = vmatprep.subr.bf16.mxu0 0
        %398 = vmatpush1.bf16.msra.mxu0 0
        %399 = vmatprep.subr.bf16.mxu0 0
        %400 = vmatpush1.bf16.msra.mxu0 0
        %401 = vmatprep.subr.bf16.mxu0 0
        %402 = vmatpush1.bf16.msra.mxu0 0
        %403 = vmatprep.subr.bf16.mxu0 0
        %404 = vmatpush1.bf16.msra.mxu0 0
        %405 = vmatprep.subr.bf16.mxu0 0
        %406 = vmatpush1.bf16.msra.mxu0 0
        %407 = vmatprep.mubr.bf16.mxu0 0
        %408 = vmatmul.mubr.bf16.gmra.mrb[0].mxu0 %v373
        %v409 = vpop.f32.mrb[0].mxu0
        %v410 = vadd.f32 0.0, %v409
        %v411 = vpop.f32.mrb[0].mxu0
        %v412 = vpop.f32.mrb[0].mxu0
        %v413 = vadd.f32 0.0, %v412
        %v414 = vpop.f32.mrb[0].mxu0
        %415 = vdwg.mxu0
        %v424 = vunpack.c.l.b16 %v328
        %v425 = vunpack.c.l.b16 %v329
        %v426 = vunpack.c.l.b16 %v330
        %v427 = vunpack.c.l.b16 %v331
        %v428 = vunpack.c.l.b16 %v332
        %v429 = vunpack.c.l.b16 %v333
        %v430 = vunpack.c.l.b16 %v334
        %v431 = vunpack.c.l.b16 %v335
        %v432 = vpack.c.b16 %v425, %v424
        %v433 = vpack.c.b16 %v427, %v426
        %v434 = vpack.c.b16 %v429, %v428
        %v435 = vpack.c.b16 %v431, %v430
        %v441 = vsel %vm322, %v327, 0
        %443 = vmatprep.subr.bf16.mxu0 0
        %444 = vmatpush1.bf16.msra.mxu0 %v432
        %445 = vmatprep.subr.bf16.mxu0 0
        %446 = vmatpush1.bf16.msra.mxu0 %v433
        %447 = vmatprep.subr.bf16.mxu0 0
        %448 = vmatpush1.bf16.msra.mxu0 %v434
        %449 = vmatprep.subr.bf16.mxu0 0
        %450 = vmatpush1.bf16.msra.mxu0 %v435
        %451 = vmatprep.subr.bf16.mxu0 0
        %452 = vmatpush1.bf16.msra.mxu0 0
        %453 = vmatprep.subr.bf16.mxu0 0
        %454 = vmatpush1.bf16.msra.mxu0 0
        %455 = vmatprep.subr.bf16.mxu0 0
        %456 = vmatpush1.bf16.msra.mxu0 0
        %457 = vmatprep.subr.bf16.mxu0 0
        %458 = vmatpush1.bf16.msra.mxu0 0
        %459 = vmatprep.subr.bf16.mxu0 0
        %460 = vmatpush1.bf16.msra.mxu0 0
        %461 = vmatprep.subr.bf16.mxu0 0
        %462 = vmatpush1.bf16.msra.mxu0 0
        %463 = vmatprep.subr.bf16.mxu0 0
        %464 = vmatpush1.bf16.msra.mxu0 0
        %465 = vmatprep.subr.bf16.mxu0 0
        %466 = vmatpush1.bf16.msra.mxu0 0
        %467 = vmatprep.subr.bf16.mxu0 0
        %468 = vmatpush1.bf16.msra.mxu0 0
        %469 = vmatprep.subr.bf16.mxu0 0
        %470 = vmatpush1.bf16.msra.mxu0 0
        %471 = vmatprep.subr.bf16.mxu0 0
        %472 = vmatpush1.bf16.msra.mxu0 0
        %473 = vmatprep.subr.bf16.mxu0 0
        %474 = vmatpush1.bf16.msra.mxu0 0
        %475 = vmatprep.mubr.bf16.mxu0 0
        %476 = vmatmul.mubr.bf16.gmra.mrb[0].mxu0 %v441
        %v477 = vpop.f32.mrb[0].mxu0
        %v478 = vadd.f32 %v410, %v477
        %v479 = vpop.f32.mrb[0].mxu0
        %v480 = vpop.f32.mrb[0].mxu0
        %v481 = vadd.f32 %v413, %v480
        %v482 = vpop.f32.mrb[0].mxu0
        %483 = vdwg.mxu0
        %v484 = vld [vmem:[#allocation2 + $0x2] sm:$0xff]
        %v485 = vld [vmem:[#allocation2 + $0xa] sm:$0xff]
        %v486 = vpack.c.bf16 %v485, %v484
        %s487 = scalar_lea.vmem [#allocation7], 64
        %v488 = vld [vmem:[%s487] sm:$0xf]
        %v489 = vld [vmem:[%s487 + $0x4] sm:$0xf]
        %v490 = vld [vmem:[%s487 + $0x8] sm:$0xf]
        %v491 = vld [vmem:[%s487 + $0xc] sm:$0xf]
        %v492 = vld [vmem:[%s487 + $0x10] sm:$0xf]
        %v493 = vld [vmem:[%s487 + $0x14] sm:$0xf]
        %v494 = vld [vmem:[%s487 + $0x18] sm:$0xf]
        %v495 = vld [vmem:[%s487 + $0x1c] sm:$0xf]
        %v504 = vunpack.c.l.b16 %v488
        %v505 = vunpack.c.l.b16 %v489
        %v506 = vunpack.c.l.b16 %v490
        %v507 = vunpack.c.l.b16 %v491
        %v508 = vunpack.c.l.b16 %v492
        %v509 = vunpack.c.l.b16 %v493
        %v510 = vunpack.c.l.b16 %v494
        %v511 = vunpack.c.l.b16 %v495
        %v512 = vpack.c.b16 %v505, %v504
        %v513 = vpack.c.b16 %v507, %v506
        %v514 = vpack.c.b16 %v509, %v508
        %v515 = vpack.c.b16 %v511, %v510
        %v521 = vsel %vm322, %v486, 0
        %523 = vmatprep.subr.bf16.mxu0 0
        %524 = vmatpush1.bf16.msra.mxu0 %v512
        %525 = vmatprep.subr.bf16.mxu0 0
        %526 = vmatpush1.bf16.msra.mxu0 %v513
        %527 = vmatprep.subr.bf16.mxu0 0
        %528 = vmatpush1.bf16.msra.mxu0 %v514
        %529 = vmatprep.subr.bf16.mxu0 0
        %530 = vmatpush1.bf16.msra.mxu0 %v515
        %531 = vmatprep.subr.bf16.mxu0 0
        %532 = vmatpush1.bf16.msra.mxu0 0
        %533 = vmatprep.subr.bf16.mxu0 0
        %534 = vmatpush1.bf16.msra.mxu0 0
        %535 = vmatprep.subr.bf16.mxu0 0
        %536 = vmatpush1.bf16.msra.mxu0 0
        %537 = vmatprep.subr.bf16.mxu0 0
        %538 = vmatpush1.bf16.msra.mxu0 0
        %539 = vmatprep.subr.bf16.mxu0 0
        %540 = vmatpush1.bf16.msra.mxu0 0
        %541 = vmatprep.subr.bf16.mxu0 0
        %542 = vmatpush1.bf16.msra.mxu0 0
        %543 = vmatprep.subr.bf16.mxu0 0
        %544 = vmatpush1.bf16.msra.mxu0 0
        %545 = vmatprep.subr.bf16.mxu0 0
        %546 = vmatpush1.bf16.msra.mxu0 0
        %547 = vmatprep.subr.bf16.mxu0 0
        %548 = vmatpush1.bf16.msra.mxu0 0
        %549 = vmatprep.subr.bf16.mxu0 0
        %550 = vmatpush1.bf16.msra.mxu0 0
        %551 = vmatprep.subr.bf16.mxu0 0
        %552 = vmatpush1.bf16.msra.mxu0 0
        %553 = vmatprep.subr.bf16.mxu0 0
        %554 = vmatpush1.bf16.msra.mxu0 0
        %555 = vmatprep.mubr.bf16.mxu0 0
        %556 = vmatmul.mubr.bf16.gmra.mrb[0].mxu0 %v521
        %v557 = vpop.f32.mrb[0].mxu0
        %v558 = vadd.f32 0.0, %v557
        %v559 = vpop.f32.mrb[0].mxu0
        %v560 = vpop.f32.mrb[0].mxu0
        %v561 = vadd.f32 0.0, %v560
        %v562 = vpop.f32.mrb[0].mxu0
        %563 = vdwg.mxu0
        %v564 = vadd.f32 %v478, %v558
        %v565 = vadd.f32 %v481, %v561
        %v566 = vld [vmem:[%s2] sm:$0x1]
        %v568 = vlaneseq
        %v569 = vshrl.u32 %v568, 7
        %v570 = vsub.s32 0, %v569
        %v571 = vrot.slane %v566, %v570
        %v573 = vadd.f32 %v564, %v571
        %v574 = vadd.f32 %v565, %v571
        %v575 = vmax.f32 %v573, 0.0
        %v576 = vmax.f32 %v574, 0.0
        %577 = vst [vmem:[#allocation3] sm:$0x1] 0.0
        %578 = vst [vmem:[#allocation3 + $0x11] sm:$0x1] 0.0
        %579 = vst [vmem:[#allocation3 + $0x1] sm:$0xff] %v575
        %580 = vst [vmem:[#allocation3 + $0x9] sm:$0xff] %v576
        %v581 = vld [vmem:[#allocation3] sm:$0xff]
        %v582 = vld [vmem:[#allocation3 + $0x8] sm:$0xff]
        %v583 = vpack.c.bf16 %v582, %v581
        %v584 = vld [vmem:[#allocation9] sm:$0xf]
        %v585 = vld [vmem:[#allocation9 + $0x4] sm:$0xf]
        %v586 = vld [vmem:[#allocation9 + $0x8] sm:$0xf]
        %v587 = vld [vmem:[#allocation9 + $0xc] sm:$0xf]
        %v588 = vld [vmem:[#allocation9 + $0x10] sm:$0xf]
        %v589 = vld [vmem:[#allocation9 + $0x14] sm:$0xf]
        %v590 = vld [vmem:[#allocation9 + $0x18] sm:$0xf]
        %v591 = vld [vmem:[#allocation9 + $0x1c] sm:$0xf]
        %v592 = vld [vmem:[#allocation9 + $0x20] sm:$0xf]
        %v593 = vld [vmem:[#allocation9 + $0x24] sm:$0xf]
        %v594 = vld [vmem:[#allocation9 + $0x28] sm:$0xf]
        %v595 = vld [vmem:[#allocation9 + $0x2c] sm:$0xf]
        %v596 = vld [vmem:[#allocation9 + $0x30] sm:$0xf]
        %v597 = vld [vmem:[#allocation9 + $0x34] sm:$0xf]
        %v598 = vld [vmem:[#allocation9 + $0x38] sm:$0xf]
        %v599 = vld [vmem:[#allocation9 + $0x3c] sm:$0xf]
        %v600 = vld [vmem:[#allocation3 + $0x1] sm:$0xff]
        %v601 = vld [vmem:[#allocation3 + $0x9] sm:$0xff]
        %v602 = vpack.c.bf16 %v601, %v600
        %s603 = scalar_lea.vmem [#allocation9], 64
        %v604 = vld [vmem:[%s603] sm:$0xf]
        %v605 = vld [vmem:[%s603 + $0x4] sm:$0xf]
        %v606 = vld [vmem:[%s603 + $0x8] sm:$0xf]
        %v607 = vld [vmem:[%s603 + $0xc] sm:$0xf]
        %v608 = vld [vmem:[%s603 + $0x10] sm:$0xf]
        %v609 = vld [vmem:[%s603 + $0x14] sm:$0xf]
        %v610 = vld [vmem:[%s603 + $0x18] sm:$0xf]
        %v611 = vld [vmem:[%s603 + $0x1c] sm:$0xf]
        %v612 = vld [vmem:[%s603 + $0x20] sm:$0xf]
        %v613 = vld [vmem:[%s603 + $0x24] sm:$0xf]
        %v614 = vld [vmem:[%s603 + $0x28] sm:$0xf]
        %v615 = vld [vmem:[%s603 + $0x2c] sm:$0xf]
        %v616 = vld [vmem:[%s603 + $0x30] sm:$0xf]
        %v617 = vld [vmem:[%s603 + $0x34] sm:$0xf]
        %v618 = vld [vmem:[%s603 + $0x38] sm:$0xf]
        %v619 = vld [vmem:[%s603 + $0x3c] sm:$0xf]
        %v636 = vunpack.c.l.b16 %v604
        %v637 = vunpack.c.l.b16 %v605
        %v638 = vunpack.c.l.b16 %v606
        %v639 = vunpack.c.l.b16 %v607
        %v640 = vunpack.c.l.b16 %v608
        %v641 = vunpack.c.l.b16 %v609
        %v642 = vunpack.c.l.b16 %v610
        %v643 = vunpack.c.l.b16 %v611
        %v644 = vunpack.c.l.b16 %v612
        %v645 = vunpack.c.l.b16 %v613
        %v646 = vunpack.c.l.b16 %v614
        %v647 = vunpack.c.l.b16 %v615
        %v648 = vunpack.c.l.b16 %v616
        %v649 = vunpack.c.l.b16 %v617
        %v650 = vunpack.c.l.b16 %v618
        %v651 = vunpack.c.l.b16 %v619
        %v652 = vpack.c.b16 %v637, %v636
        %v653 = vpack.c.b16 %v639, %v638
        %v654 = vpack.c.b16 %v641, %v640
        %v655 = vpack.c.b16 %v643, %v642
        %v656 = vpack.c.b16 %v645, %v644
        %v657 = vpack.c.b16 %v647, %v646
        %v658 = vpack.c.b16 %v649, %v648
        %v659 = vpack.c.b16 %v651, %v650
        %668 = vmatprep.subr.bf16.mxu0 0
        %669 = vmatpush1.bf16.msra.mxu0 %v652
        %670 = vmatprep.subr.bf16.mxu0 0
        %671 = vmatpush1.bf16.msra.mxu0 %v653
        %672 = vmatprep.subr.bf16.mxu0 0
        %673 = vmatpush1.bf16.msra.mxu0 %v654
        %674 = vmatprep.subr.bf16.mxu0 0
        %675 = vmatpush1.bf16.msra.mxu0 %v655
        %676 = vmatprep.subr.bf16.mxu0 0
        %677 = vmatpush1.bf16.msra.mxu0 %v656
        %678 = vmatprep.subr.bf16.mxu0 0
        %679 = vmatpush1.bf16.msra.mxu0 %v657
        %680 = vmatprep.subr.bf16.mxu0 0
        %681 = vmatpush1.bf16.msra.mxu0 %v658
        %682 = vmatprep.subr.bf16.mxu0 0
        %683 = vmatpush1.bf16.msra.mxu0 %v659
        %684 = vmatprep.subr.bf16.mxu0 0
        %685 = vmatpush1.bf16.msra.mxu0 0
        %686 = vmatprep.subr.bf16.mxu0 0
        %687 = vmatpush1.bf16.msra.mxu0 0
        %688 = vmatprep.subr.bf16.mxu0 0
        %689 = vmatpush1.bf16.msra.mxu0 0
        %690 = vmatprep.subr.bf16.mxu0 0
        %691 = vmatpush1.bf16.msra.mxu0 0
        %692 = vmatprep.subr.bf16.mxu0 0
        %693 = vmatpush1.bf16.msra.mxu0 0
        %694 = vmatprep.subr.bf16.mxu0 0
        %695 = vmatpush1.bf16.msra.mxu0 0
        %696 = vmatprep.subr.bf16.mxu0 0
        %697 = vmatpush1.bf16.msra.mxu0 0
        %698 = vmatprep.subr.bf16.mxu0 0
        %699 = vmatpush1.bf16.msra.mxu0 0
        %700 = vmatprep.mubr.bf16.mxu0 0
        %701 = vmatmul.mubr.bf16.gmra.mrb[0].mxu0 %v602
        %v702 = vpop.f32.mrb[0].mxu0
        %v703 = vadd.f32 0.0, %v702
        %v704 = vpop.f32.mrb[0].mxu0
        %v705 = vpop.f32.mrb[0].mxu0
        %v706 = vadd.f32 0.0, %v705
        %v707 = vpop.f32.mrb[0].mxu0
        %708 = vdwg.mxu0
        %v725 = vunpack.c.l.b16 %v584
        %v726 = vunpack.c.l.b16 %v585
        %v727 = vunpack.c.l.b16 %v586
        %v728 = vunpack.c.l.b16 %v587
        %v729 = vunpack.c.l.b16 %v588
        %v730 = vunpack.c.l.b16 %v589
        %v731 = vunpack.c.l.b16 %v590
        %v732 = vunpack.c.l.b16 %v591
        %v733 = vunpack.c.l.b16 %v592
        %v734 = vunpack.c.l.b16 %v593
        %v735 = vunpack.c.l.b16 %v594
        %v736 = vunpack.c.l.b16 %v595
        %v737 = vunpack.c.l.b16 %v596
        %v738 = vunpack.c.l.b16 %v597
        %v739 = vunpack.c.l.b16 %v598
        %v740 = vunpack.c.l.b16 %v599
        %v741 = vpack.c.b16 %v726, %v725
        %v742 = vpack.c.b16 %v728, %v727
        %v743 = vpack.c.b16 %v730, %v729
        %v744 = vpack.c.b16 %v732, %v731
        %v745 = vpack.c.b16 %v734, %v733
        %v746 = vpack.c.b16 %v736, %v735
        %v747 = vpack.c.b16 %v738, %v737
        %v748 = vpack.c.b16 %v740, %v739
        %757 = vmatprep.subr.bf16.mxu0 0
        %758 = vmatpush1.bf16.msra.mxu0 %v741
        %759 = vmatprep.subr.bf16.mxu0 0
        %760 = vmatpush1.bf16.msra.mxu0 %v742
        %761 = vmatprep.subr.bf16.mxu0 0
        %762 = vmatpush1.bf16.msra.mxu0 %v743
        %763 = vmatprep.subr.bf16.mxu0 0
        %764 = vmatpush1.bf16.msra.mxu0 %v744
        %765 = vmatprep.subr.bf16.mxu0 0
        %766 = vmatpush1.bf16.msra.mxu0 %v745
        %767 = vmatprep.subr.bf16.mxu0 0
        %768 = vmatpush1.bf16.msra.mxu0 %v746
        %769 = vmatprep.subr.bf16.mxu0 0
        %770 = vmatpush1.bf16.msra.mxu0 %v747
        %771 = vmatprep.subr.bf16.mxu0 0
        %772 = vmatpush1.bf16.msra.mxu0 %v748
        %773 = vmatprep.subr.bf16.mxu0 0
        %774 = vmatpush1.bf16.msra.mxu0 0
        %775 = vmatprep.subr.bf16.mxu0 0
        %776 = vmatpush1.bf16.msra.mxu0 0
        %777 = vmatprep.subr.bf16.mxu0 0
        %778 = vmatpush1.bf16.msra.mxu0 0
        %779 = vmatprep.subr.bf16.mxu0 0
        %780 = vmatpush1.bf16.msra.mxu0 0
        %781 = vmatprep.subr.bf16.mxu0 0
        %782 = vmatpush1.bf16.msra.mxu0 0
        %783 = vmatprep.subr.bf16.mxu0 0
        %784 = vmatpush1.bf16.msra.mxu0 0
        %785 = vmatprep.subr.bf16.mxu0 0
        %786 = vmatpush1.bf16.msra.mxu0 0
        %787 = vmatprep.subr.bf16.mxu0 0
        %788 = vmatpush1.bf16.msra.mxu0 0
        %789 = vmatprep.mubr.bf16.mxu0 0
        %790 = vmatmul.mubr.bf16.gmra.mrb[0].mxu0 %v583
        %v791 = vpop.f32.mrb[0].mxu0
        %v792 = vadd.f32 %v703, %v791
        %v793 = vpop.f32.mrb[0].mxu0
        %v794 = vpop.f32.mrb[0].mxu0
        %v795 = vadd.f32 %v706, %v794
        %v796 = vpop.f32.mrb[0].mxu0
        %797 = vdwg.mxu0
        %v798 = vld [vmem:[#allocation3 + $0x2] sm:$0xff]
        %v799 = vld [vmem:[#allocation3 + $0xa] sm:$0xff]
        %v800 = vpack.c.bf16 %v799, %v798
        %s801 = scalar_lea.vmem [#allocation9], 128
        %v802 = vld [vmem:[%s801] sm:$0xf]
        %v803 = vld [vmem:[%s801 + $0x4] sm:$0xf]
        %v804 = vld [vmem:[%s801 + $0x8] sm:$0xf]
        %v805 = vld [vmem:[%s801 + $0xc] sm:$0xf]
        %v806 = vld [vmem:[%s801 + $0x10] sm:$0xf]
        %v807 = vld [vmem:[%s801 + $0x14] sm:$0xf]
        %v808 = vld [vmem:[%s801 + $0x18] sm:$0xf]
        %v809 = vld [vmem:[%s801 + $0x1c] sm:$0xf]
        %v810 = vld [vmem:[%s801 + $0x20] sm:$0xf]
        %v811 = vld [vmem:[%s801 + $0x24] sm:$0xf]
        %v812 = vld [vmem:[%s801 + $0x28] sm:$0xf]
        %v813 = vld [vmem:[%s801 + $0x2c] sm:$0xf]
        %v814 = vld [vmem:[%s801 + $0x30] sm:$0xf]
        %v815 = vld [vmem:[%s801 + $0x34] sm:$0xf]
        %v816 = vld [vmem:[%s801 + $0x38] sm:$0xf]
        %v817 = vld [vmem:[%s801 + $0x3c] sm:$0xf]
        %v834 = vunpack.c.l.b16 %v802
        %v835 = vunpack.c.l.b16 %v803
        %v836 = vunpack.c.l.b16 %v804
        %v837 = vunpack.c.l.b16 %v805
        %v838 = vunpack.c.l.b16 %v806
        %v839 = vunpack.c.l.b16 %v807
        %v840 = vunpack.c.l.b16 %v808
        %v841 = vunpack.c.l.b16 %v809
        %v842 = vunpack.c.l.b16 %v810
        %v843 = vunpack.c.l.b16 %v811
        %v844 = vunpack.c.l.b16 %v812
        %v845 = vunpack.c.l.b16 %v813
        %v846 = vunpack.c.l.b16 %v814
        %v847 = vunpack.c.l.b16 %v815
        %v848 = vunpack.c.l.b16 %v816
        %v849 = vunpack.c.l.b16 %v817
        %v850 = vpack.c.b16 %v835, %v834
        %v851 = vpack.c.b16 %v837, %v836
        %v852 = vpack.c.b16 %v839, %v838
        %v853 = vpack.c.b16 %v841, %v840
        %v854 = vpack.c.b16 %v843, %v842
        %v855 = vpack.c.b16 %v845, %v844
        %v856 = vpack.c.b16 %v847, %v846
        %v857 = vpack.c.b16 %v849, %v848
        %866 = vmatprep.subr.bf16.mxu0 0
        %867 = vmatpush1.bf16.msra.mxu0 %v850
        %868 = vmatprep.subr.bf16.mxu0 0
        %869 = vmatpush1.bf16.msra.mxu0 %v851
        %870 = vmatprep.subr.bf16.mxu0 0
        %871 = vmatpush1.bf16.msra.mxu0 %v852
        %872 = vmatprep.subr.bf16.mxu0 0
        %873 = vmatpush1.bf16.msra.mxu0 %v853
        %874 = vmatprep.subr.bf16.mxu0 0
        %875 = vmatpush1.bf16.msra.mxu0 %v854
        %876 = vmatprep.subr.bf16.mxu0 0
        %877 = vmatpush1.bf16.msra.mxu0 %v855
        %878 = vmatprep.subr.bf16.mxu0 0
        %879 = vmatpush1.bf16.msra.mxu0 %v856
        %880 = vmatprep.subr.bf16.mxu0 0
        %881 = vmatpush1.bf16.msra.mxu0 %v857
        %882 = vmatprep.subr.bf16.mxu0 0
        %883 = vmatpush1.bf16.msra.mxu0 0
        %884 = vmatprep.subr.bf16.mxu0 0
        %885 = vmatpush1.bf16.msra.mxu0 0
        %886 = vmatprep.subr.bf16.mxu0 0
        %887 = vmatpush1.bf16.msra.mxu0 0
        %888 = vmatprep.subr.bf16.mxu0 0
        %889 = vmatpush1.bf16.msra.mxu0 0
        %890 = vmatprep.subr.bf16.mxu0 0
        %891 = vmatpush1.bf16.msra.mxu0 0
        %892 = vmatprep.subr.bf16.mxu0 0
        %893 = vmatpush1.bf16.msra.mxu0 0
        %894 = vmatprep.subr.bf16.mxu0 0
        %895 = vmatpush1.bf16.msra.mxu0 0
        %896 = vmatprep.subr.bf16.mxu0 0
        %897 = vmatpush1.bf16.msra.mxu0 0
        %898 = vmatprep.mubr.bf16.mxu0 0
        %899 = vmatmul.mubr.bf16.gmra.mrb[0].mxu0 %v800
        %v900 = vpop.f32.mrb[0].mxu0
        %v901 = vadd.f32 0.0, %v900
        %v902 = vpop.f32.mrb[0].mxu0
        %v903 = vpop.f32.mrb[0].mxu0
        %v904 = vadd.f32 0.0, %v903
        %v905 = vpop.f32.mrb[0].mxu0
        %906 = vdwg.mxu0
        %v907 = vadd.f32 %v792, %v901
        %v908 = vadd.f32 %v795, %v904
        %v909 = vld [vmem:[%s273] sm:$0xf]
        %v910 = vld [vmem:[%s273 + $0x4] sm:$0xf]
        %v911 = vld [vmem:[#allocation10] sm:$0xf]
        %v912 = vld [vmem:[#allocation10 + $0x4] sm:$0xf]
        %v913 = vld [vmem:[#allocation10 + $0x8] sm:$0xf]
        %v914 = vld [vmem:[#allocation10 + $0xc] sm:$0xf]
        %v915 = vld [vmem:[#allocation10 + $0x10] sm:$0xf]
        %v916 = vld [vmem:[#allocation10 + $0x14] sm:$0xf]
        %v917 = vld [vmem:[#allocation10 + $0x18] sm:$0xf]
        %v918 = vld [vmem:[#allocation10 + $0x1c] sm:$0xf]
        %v921 = vunpack.c.l.b16 %v909
        %v922 = vunpack.c.l.b16 %v910
        %v923 = vpack.c.b16 %v922, %v921
        %v932 = vunpack.c.l.b16 %v911
        %v933 = vunpack.c.l.b16 %v912
        %v934 = vunpack.c.l.b16 %v913
        %v935 = vunpack.c.l.b16 %v914
        %v936 = vunpack.c.l.b16 %v915
        %v937 = vunpack.c.l.b16 %v916
        %v938 = vunpack.c.l.b16 %v917
        %v939 = vunpack.c.l.b16 %v918
        %v940 = vpack.c.b16 %v933, %v932
        %v941 = vpack.c.b16 %v935, %v934
        %v942 = vpack.c.b16 %v937, %v936
        %v943 = vpack.c.b16 %v939, %v938
        %v949 = vsel %vm322, %v923, 0
        %951 = vmatprep.subr.bf16.mxu0 0
        %952 = vmatpush1.bf16.msra.mxu0 %v940
        %953 = vmatprep.subr.bf16.mxu0 0
        %954 = vmatpush1.bf16.msra.mxu0 %v941
        %955 = vmatprep.subr.bf16.mxu0 0
        %956 = vmatpush1.bf16.msra.mxu0 %v942
        %957 = vmatprep.subr.bf16.mxu0 0
        %958 = vmatpush1.bf16.msra.mxu0 %v943
        %959 = vmatprep.subr.bf16.mxu0 0
        %960 = vmatpush1.bf16.msra.mxu0 0
        %961 = vmatprep.subr.bf16.mxu0 0
        %962 = vmatpush1.bf16.msra.mxu0 0
        %963 = vmatprep.subr.bf16.mxu0 0
        %964 = vmatpush1.bf16.msra.mxu0 0
        %965 = vmatprep.subr.bf16.mxu0 0
        %966 = vmatpush1.bf16.msra.mxu0 0
        %967 = vmatprep.subr.bf16.mxu0 0
        %968 = vmatpush1.bf16.msra.mxu0 0
        %969 = vmatprep.subr.bf16.mxu0 0
        %970 = vmatpush1.bf16.msra.mxu0 0
        %971 = vmatprep.subr.bf16.mxu0 0
        %972 = vmatpush1.bf16.msra.mxu0 0
        %973 = vmatprep.subr.bf16.mxu0 0
        %974 = vmatpush1.bf16.msra.mxu0 0
        %975 = vmatprep.subr.bf16.mxu0 0
        %976 = vmatpush1.bf16.msra.mxu0 0
        %977 = vmatprep.subr.bf16.mxu0 0
        %978 = vmatpush1.bf16.msra.mxu0 0
        %979 = vmatprep.subr.bf16.mxu0 0
        %980 = vmatpush1.bf16.msra.mxu0 0
        %981 = vmatprep.subr.bf16.mxu0 0
        %982 = vmatpush1.bf16.msra.mxu0 0
        %983 = vmatprep.mubr.bf16.mxu0 0
        %984 = vmatmul.mubr.bf16.gmra.mrb[0].mxu0 %v949
        %v985 = vpop.f32.mrb[0].mxu0
        %v986 = vadd.f32 0.0, %v985
        %v987 = vpop.f32.mrb[0].mxu0
        %v988 = vpop.f32.mrb[0].mxu0
        %v989 = vadd.f32 0.0, %v988
        %v990 = vpop.f32.mrb[0].mxu0
        %991 = vdwg.mxu0
        %v992 = vadd.f32 %v907, %v986
        %v993 = vadd.f32 %v908, %v989
        %v994 = vld [vmem:[%s5] sm:$0x1]
        %v996 = vlaneseq
        %v997 = vshrl.u32 %v996, 7
        %v998 = vsub.s32 0, %v997
        %v999 = vrot.slane %v994, %v998
        %v1001 = vadd.f32 %v992, %v999
        %v1002 = vadd.f32 %v993, %v999
        %v1003 = vmax.f32 %v1001, 0.0
        %v1004 = vmax.f32 %v1002, 0.0
        %1005 = vst [vmem:[%s313] sm:$0xff] %v1003
        %1006 = vst [vmem:[%s313 + $0x8] sm:$0xff] %v1004
        %s1007 = sand.u32 %s164, 1
        %s1008 = scalar_lea.sflag [#allocation6], %s1007
        %s1009 = sand.u32 %s164, 1
        %s1010 = smul.addr %s1009, 16
        %s1011 = scalar_lea.vmem [#allocation12], %s1010
        // Predicated region
        $region61: #{tpu_custom_call.1} parent=43 // pred_check
          %p1012 = pneg %p174
        $region62: #{tpu_custom_call.1} parent=43 // pred_check_branch
          %1014 = sbr.rel (%p1012) target = $region64
        $region63: #{tpu_custom_call.1} parent=43 // pred_region
          %s1016 = ssub.s32 256, 256
          %1017 = vsyncadd %s1008, %s1016
          %s1018 = smul.addr %s25, 2
          %s1019 = smul.addr %s1018, 128
          %s1020 = scalar_lea.hbm %s6, %s1019
          %s1021 = sshll.u32 %s1011, 4
          %s1022 = int_to_ptr.vmem [resolvable:$true] %s1021
          %1027 = dma.vmem_to_hbm [thread:$0]  %s1022, 256, %s1020, %s1008, 128, 128, 8
        $region64: #{tpu_custom_call.1} parent=43 // pred_fallthru
          _
      $region44: #{tpu_custom_call.1} parent=5 // pred_fallthru
        _
      %p1028 = scmp.le.s32.totalorder 2, %s20
      // Predicated region
      $region65: #{tpu_custom_call.1} parent=5 // pred_check
        %p1029 = pneg %p1028
      $region66: #{tpu_custom_call.1} parent=5 // pred_check_branch
        %1031 = sbr.rel (%p1029) target = $region68
      $region67: #{tpu_custom_call.1} parent=5 // pred_region
        %s1032 = ssub.s32 %s20, 2
        // Predicated region
        $region69: #{tpu_custom_call.1} parent=67 // pred_check
          %p1033 = pneg %p180
        $region70: #{tpu_custom_call.1} parent=67 // pred_check_branch
          %1035 = sbr.rel (%p1033) target = $region72
        $region71: #{tpu_custom_call.1} parent=67 // pred_region
          %s1036 = sand.u32 %s165, 1
          %s1037 = scalar_lea.sflag [#allocation6], %s1036
          %s1038 = sand.u32 %s165, 1
          %s1039 = smul.addr %s1038, 16
          %s1040 = scalar_lea.vmem [#allocation12], %s1039
          %1041 = dma.done %s1037, 256
        $region72: #{tpu_custom_call.1} parent=67 // pred_fallthru
          _
      $region68: #{tpu_custom_call.1} parent=5 // pred_fallthru
        _
    $region6: #{tpu_custom_call.1} parent=1 // loop_footer
      %s24 = sadd.s32 1, %s20
    $region7: #{tpu_custom_call.1} parent=1 // loop_footer_branch
      %19 = sbr.rel target = $region3
    $region8: #{tpu_custom_call.1} parent=1 // loop_exit
      _
    %1042 = vsyncpa [#allocation5], 1
    %s1043 = scalar_lea.sflag [#allocation5], 1
    %1044 = vsyncpa %s1043, 1
    %1045 = vsyncpa [#allocation8], 1
    %1046 = vsyncpa [#allocation11], 1
    %1047 = vsyncpa [#allocation6], 1
    %s1048 = scalar_lea.sflag [#allocation6], 1
    %1049 = vsyncpa %s1048, 1

</llo_original>
